<compile_context>
chip_gen: v7x
topology: tpu7x:2x2x1
jax: 0.10.0
libtpu: 0.0.40
codegen_flags: <defaults>
</compile_context>

<pallas_src>
import jax
import jax.numpy as jnp
from jax.experimental import pallas as pl
from jax.experimental.pallas import tpu as pltpu


# ----------------------------- Pallas kernel -----------------------------

def _conv1x1_bn_relu_kernel(x_ref, w_ref, shift_ref, o_ref):
    # x_ref:     (Cin, tHW)  input dtype (f32) -> cast to bf16 in-kernel (free VPU op,
    #                        avoids an extra HBM pass for a wrapper-side cast)
    # w_ref:     (tCout, Cin) bf16, BN scale already folded in
    # shift_ref: (tCout, 1)   f32 per-channel BN shift
    # o_ref:     (tCout, tHW) output dtype
    x = x_ref[...].astype(jnp.bfloat16)
    y = jnp.dot(w_ref[...], x, preferred_element_type=jnp.float32)   # MXU, f32 accum
    y = y + shift_ref[...]                                           # broadcast over HW lanes
    o_ref[...] = jnp.maximum(y, 0.0).astype(o_ref.dtype)


# ----------------------------- helpers -----------------------------

def _round_up(x, m):
    return ((x + m - 1) // m) * m


def _vmem_capacity_bytes():
    # Generation-aware VMEM query; conservative fallback (v7x per-core size).
    try:
        return int(pltpu.get_tpu_info().vmem_capacity_bytes)
    except Exception:
        return 64 << 20


def _pick_hw_tile(hw, bytes_per_px, target_bytes=8 << 20):
    """Largest multiple-of-128 divisor of hw whose double-buffered working set
    stays under `target_bytes` (amortizes ~0.35us/step grid overhead without
    blowing VMEM). Falls back to the full (lane-padded) extent if hw % 128 != 0."""
    if hw % 128 != 0:
        return hw
    cap = max(128, (target_bytes // max(bytes_per_px, 1)) // 128 * 128)
    best, t = 128, 128
    while t <= hw and t <= cap:
        if hw % t == 0:
            best = t
        t += 128
    return best


# ----------------------------- wrapper -----------------------------

def conv1x1_bn_relu(x_nchw, weight, gamma, beta, running_mean, running_var,
                    eps=1e-5, out_dtype=None):
    """Conv2d(num_in, num_out, kernel_size=1, bias=False) + BatchNorm2d(eval) + ReLU.

    x_nchw : (N, Cin, H, W)
    weight : (Cout, Cin)  (PyTorch 1x1 conv weight with the kernel dims squeezed)
    returns: (N, Cout, H, W) in `out_dtype` (defaults to x dtype)
    """
    n, cin, h, w = x_nchw.shape
    cout = weight.shape[0]
    hw = h * w
    if out_dtype is None:
        out_dtype = x_nchw.dtype
    out_itemsize = jnp.dtype(out_dtype).itemsize

    # Fold eval-mode BN into the conv weight (in f32, before the bf16 cast) + shift.
    scale = gamma / jnp.sqrt(running_var + eps)            # (Cout,)
    shift = beta - running_mean * scale                    # (Cout,)
    w_scaled = weight * scale[:, None]                     # (Cout, Cin) f32

    # Cout tiling: sublane axis -> pad to 16 (bf16 weight) only on the tiny
    # weight/shift operands; tile at 256 for large channel counts (v7x VMEM).
    if cout <= 512:
        tco = _round_up(cout, 16)
        cout_pad = tco
    else:
        tco = 256
        cout_pad = _round_up(cout, tco)
    n_co = cout_pad // tco

    # HW tiling: lane axis, multiple-of-128 divisor of H*W -> unmasked stores,
    # no activation padding, no wrapper jnp.pad.
    bytes_per_px = 2 * (_round_up(cin, 8) * 4 + _round_up(tco, 8) * out_itemsize)
    thw = _pick_hw_tile(hw, bytes_per_px)
    n_hw = hw // thw

    # Tiny padded parameter operands (activations are never padded/copied).
    w_pad = (jnp.zeros((cout_pad, cin), jnp.float32)
             .at[:cout].set(w_scaled).astype(jnp.bfloat16))
    shift_col = jnp.zeros((cout_pad, 1), jnp.float32).at[:cout, 0].set(shift)

    # Pure reshape (no copy): NCHW -> (N, Cin, H*W), already the kernel layout.
    x3 = x_nchw.reshape(n, cin, hw)

    grid = (n, n_hw, n_co)

    # VMEM limit from lane/sublane-rounded footprints (double-buffered), capped
    # generation-aware at 75% of physical per-core VMEM.
    x_tile = _round_up(cin, 8) * _round_up(thw, 128) * 4
    w_tile = _round_up(tco, 16) * _round_up(cin, 128) * 2
    s_tile = _round_up(tco, 8) * 128 * 4
    o_tile = _round_up(tco, 8) * _round_up(thw, 128) * out_itemsize
    vmem_bytes = 2 * (x_tile + w_tile + s_tile + o_tile)
    vmem_limit = int(min(max(2 * vmem_bytes, 16 << 20),
                         0.75 * _vmem_capacity_bytes()))

    out = pl.pallas_call(
        _conv1x1_bn_relu_kernel,
        out_shape=jax.ShapeDtypeStruct((n, cout_pad, hw), out_dtype),
        grid=grid,
        in_specs=[
            pl.BlockSpec((None, cin, thw), lambda i, j, c: (i, 0, j)),   # x
            pl.BlockSpec((tco, cin), lambda i, j, c: (c, 0)),            # weight
            pl.BlockSpec((tco, 1), lambda i, j, c: (c, 0)),              # BN shift
        ],
        out_specs=pl.BlockSpec((None, tco, thw), lambda i, j, c: (i, c, j)),
        compiler_params=pltpu.CompilerParams(
            dimension_semantics=("parallel", "parallel", "parallel"),
            vmem_limit_bytes=vmem_limit,
        ),
    )(x3, w_pad, shift_col)

    out = out[:, :cout, :] if cout_pad != cout else out     # drop Cout padding (params only)
    return out.reshape(n, cout, h, w)                        # already NCHW, pure reshape


# ----------------------------- main -----------------------------

if __name__ == "__main__":
    key = jax.random.PRNGKey(0)
    kx, kw, kg, kb, km, kv = jax.random.split(key, 6)

    num_in, num_out = 4, 32
    x = jax.random.normal(kx, (2, num_in, 16, 16), dtype=jnp.float32)   # NCHW

    weight = 0.5 * jax.random.normal(kw, (num_out, num_in), dtype=jnp.float32)
    gamma = 1.0 + 0.1 * jax.random.normal(kg, (num_out,), dtype=jnp.float32)
    beta = 0.05 * jax.random.normal(kb, (num_out,), dtype=jnp.float32)
    running_mean = 0.1 * jax.random.normal(km, (num_out,), dtype=jnp.float32)
    running_var = jnp.abs(1.0 + 0.1 * jax.random.normal(kv, (num_out,), dtype=jnp.float32))

    fwd = jax.jit(conv1x1_bn_relu)
    out = jax.block_until_ready(fwd(x, weight, gamma, beta, running_mean, running_var))

    # Plain-JAX f32 reference for the fused Conv1x1 + eval-BN + ReLU.
    ref_scale = gamma / jnp.sqrt(running_var + 1e-5)
    ref_shift = beta - running_mean * ref_scale
    ref = jnp.einsum("nchw,oc->nohw", x, weight)
    ref = ref * ref_scale[None, :, None, None] + ref_shift[None, :, None, None]
    ref = jnp.maximum(ref, 0.0)

    assert out.shape == (2, num_out, 16, 16), out.shape
    assert out.dtype == x.dtype, out.dtype
    assert bool(jnp.all(jnp.isfinite(out)))
    max_err = float(jnp.max(jnp.abs(out - ref)))
    assert max_err < 5e-2, max_err                 # bf16 operand rounding tolerance
    print("KERNEL_OK")
</pallas_src>

<mosaic_0001>
module attributes {stable_mosaic.version = 11 : i64} {
  func.func @_conv1x1_bn_relu_kernel(%arg0: i32, %arg1: i32, %arg2: i32, %arg3: memref<1x4x256xf32, #tpu.memory_space<vmem>>, %arg4: memref<32x4xbf16, #tpu.memory_space<vmem>>, %arg5: memref<32x1xf32, #tpu.memory_space<vmem>>, %arg6: memref<1x32x256xf32, #tpu.memory_space<vmem>>) attributes {dimension_semantics = [#tpu.dimension_semantics<parallel>, #tpu.dimension_semantics<parallel>, #tpu.dimension_semantics<parallel>], iteration_bounds = array<i64: 2, 1, 1>, scalar_prefetch = 0 : i64, scratch_operands = 0 : i64, tpu.core_type = #tpu.core_type<tc>, window_params = [{transform_indices = @transform_0, window_bounds = array<i64: 1, 4, 256>}, {transform_indices = @transform_1, window_bounds = array<i64: 32, 4>}, {transform_indices = @transform_2, window_bounds = array<i64: 32, 1>}, {transform_indices = @transform_3, window_bounds = array<i64: 1, 32, 256>}]} {
    %c0 = arith.constant 0 : index
    %c0_0 = arith.constant 0 : index
    %c0_1 = arith.constant 0 : index
    %0 = vector.load %arg3[%c0, %c0_0, %c0_1] : memref<1x4x256xf32, #tpu.memory_space<vmem>>, vector<1x4x256xf32>
    %1 = vector.shape_cast %0 : vector<1x4x256xf32> to vector<4x256xf32>
    %2 = arith.truncf %1 : vector<4x256xf32> to vector<4x256xbf16>
    %c0_2 = arith.constant 0 : index
    %c0_3 = arith.constant 0 : index
    %3 = vector.load %arg4[%c0_2, %c0_3] : memref<32x4xbf16, #tpu.memory_space<vmem>>, vector<32x4xbf16>
    %cst = arith.constant dense<0.000000e+00> : vector<32x256xf32>
    %4 = tpu.matmul %3, %2, %cst {dimension_numbers = #tpu.dot_dimension_numbers<[1], [0], [0], [1], [0, 0, 1, 1], [], []>} : vector<32x4xbf16>, vector<4x256xbf16>, vector<32x256xf32> -> vector<32x256xf32>
    %c0_4 = arith.constant 0 : index
    %c0_5 = arith.constant 0 : index
    %5 = vector.load %arg5[%c0_4, %c0_5] : memref<32x1xf32, #tpu.memory_space<vmem>>, vector<32x1xf32>
    %6 = vector.broadcast %5 : vector<32x1xf32> to vector<32x256xf32>
    %7 = arith.addf %4, %6 : vector<32x256xf32>
    %cst_6 = arith.constant 0.000000e+00 : f32
    %8 = vector.broadcast %cst_6 : f32 to vector<32x256xf32>
    %9 = arith.maximumf %7, %8 : vector<32x256xf32>
    %c0_7 = arith.constant 0 : index
    %c0_8 = arith.constant 0 : index
    %c0_9 = arith.constant 0 : index
    %10 = vector.load %arg6[%c0_7, %c0_8, %c0_9] : memref<1x32x256xf32, #tpu.memory_space<vmem>>, vector<1x32x256xf32>
    %11 = vector.shape_cast %10 : vector<1x32x256xf32> to vector<32x256xf32>
    %12 = vector.shape_cast %9 : vector<32x256xf32> to vector<1x32x256xf32>
    tpu.vector_store %arg6[%c0_7, %c0_8, %c0_9], %12 {strides = array<i32>} : memref<1x32x256xf32, #tpu.memory_space<vmem>>, vector<1x32x256xf32>,
    return
  }
  func.func @transform_0(%arg0: i32, %arg1: i32, %arg2: i32) -> (i32, i32, i32) {
    %c0_i32 = arith.constant 0 : i32
    %c0_i32_0 = arith.constant 0 : i32
    return %arg0, %c0_i32, %arg1 : i32, i32, i32
  }
  func.func @transform_1(%arg0: i32, %arg1: i32, %arg2: i32) -> (i32, i32) {
    %c0_i32 = arith.constant 0 : i32
    %c0_i32_0 = arith.constant 0 : i32
    return %arg2, %c0_i32 : i32, i32
  }
  func.func @transform_2(%arg0: i32, %arg1: i32, %arg2: i32) -> (i32, i32) {
    %c0_i32 = arith.constant 0 : i32
    %c0_i32_0 = arith.constant 0 : i32
    return %arg2, %c0_i32 : i32, i32
  }
  func.func @transform_3(%arg0: i32, %arg1: i32, %arg2: i32) -> (i32, i32, i32) {
    %c0_i32 = arith.constant 0 : i32
    return %arg0, %arg2, %arg1 : i32, i32, i32
  }
}

</mosaic_0001>

<llo_original>
// kernel: conv1x1_bn_relu.1
$region0: #{conv1x1_bn_relu.1}
  #allocation0 [shape = 'u32[]', space=smem, size = 0x4, offset = 0x4, fixed_abs, tag = 'smem constant byte address 0x4 - core index']
  #allocation1 [shape = 'u32[144,128]{1,0:T(1,128)}', space=vmem, size = 0x12000, scoped, tag = 'internal scratch']
  %s0 = inlined_call_operand.vmem [shape: f32[2,4,256], index: 0, kind: input, shape index: {}]
  %s1 = inlined_call_operand.vmem [shape: bf16[32,4], index: 1, kind: input, shape index: {}]
  %s2 = inlined_call_operand.vmem [shape: f32[32,1], index: 2, kind: input, shape index: {}]
  %s3 = inlined_call_operand.vmem [shape: f32[2,32,256], index: 3, kind: output, shape index: {}]
  %s4 = sld [smem:[#allocation0]]
  $region45: #{conv1x1_bn_relu.1} parent=0
    _
  %s6 = ssub.s32 1, %s4
  %s7 = scalar_select 0, %s6, %s4
  loop: start=0, step=1, limit=4
  $region2: #{conv1x1_bn_relu.1} parent=0 // loop_pre_header
    _
  $region3: #{conv1x1_bn_relu.1} parent=0 // loop_header
    %s9 = sphi 0, %s13
    %p10 = scmp.ge.s32.totalorder %s9, 4
    %s16 = sphi 0, %s35
    %s17 = sphi 0, %s31
    %s18 = sphi 0, %s27
    %s19 = sphi 0, %s16
    %s20 = sphi 0, %s17
    %s21 = sphi 0, %s18
    %s22 = sphi 0, %s19
    %s23 = sphi 0, %s20
    %s24 = sphi 0, %s21
    %s40 = sphi 0, %s42
    %s43 = sphi 0, %s40
    %s44 = sphi 0, %s43
    %s60 = sphi 0, %s44
    %s66 = sphi 0, %s68
    %s69 = sphi 0, %s66
    %s70 = sphi 0, %s69
    %s86 = sphi 0, %s70
    %s92 = sphi 0, %s94
    %s95 = sphi 0, %s92
    %s96 = sphi 0, %s95
    %s112 = sphi 0, %s96
    %s122 = sphi 0, %s124
    %s125 = sphi 0, %s122
    %s126 = sphi 0, %s125
    %s142 = sphi 0, %s126
  $region4: #{conv1x1_bn_relu.1} parent=0 // loop_header_branch
    %12 = sbr.rel (%p10) target = $region8
  $region5: #{conv1x1_bn_relu.1} parent=0 // loop_body
    %s14 = ssub.s32 %s9, 1
    %s15 = ssub.s32 %s9, 2
    %s25 = sadd.s32 1, %s18
    %p26 = scmp.ge.s32.totalorder %s25, 1
    %s27 = scalar_select %p26, 0, %s25
    %s28 = sadd.s32 1, %s17
    %s29 = scalar_select %p26, %s28, %s17
    %p30 = scmp.ge.s32.totalorder %s29, 1
    %s31 = scalar_select %p30, 0, %s29
    %s32 = sadd.s32 1, %s16
    %s33 = scalar_select %p30, %s32, %s16
    %p34 = scmp.ge.s32.totalorder %s33, 2
    %s35 = scalar_select %p34, 0, %s33
    %s36 = ssub.s32 %s16, %s35
    %s37 = ssub.s32 %s17, %s31
    %s38 = sor.u32 %s36, %s37
    %p39 = scmp.eq.s32.totalorder %s38, 0
    %s41 = sadd.s32 %s40, 1
    %s42 = scalar_select %p39, %s40, %s41
    %p45 = pneg %p39
    %p46 = scmp.eq.s32.totalorder %s9, 1
    %p47 = por %p45, %p46
    %p48 = scmp.ne.s32.totalorder %s40, %s43
    %p49 = scmp.eq.s32.totalorder %s9, 0
    %p50 = por %p48, %p49
    %p51 = scmp.ne.s32.totalorder %s40, %s43
    %p52 = scmp.eq.s32.totalorder %s14, 1
    %p53 = por %p51, %p52
    %p54 = scmp.ne.s32.totalorder %s43, %s44
    %p55 = scmp.eq.s32.totalorder %s14, 0
    %p56 = por %p54, %p55
    %p57 = scmp.ne.s32.totalorder %s43, %s44
    %p58 = scmp.eq.s32.totalorder %s15, 1
    %p59 = por %p57, %p58
    %p61 = scmp.ne.s32.totalorder %s44, %s60
    %p62 = scmp.eq.s32.totalorder %s15, 0
    %p63 = por %p61, %p62
    %s64 = ssub.s32 %s18, %s27
    %p65 = scmp.eq.s32.totalorder %s64, 0
    %s67 = sadd.s32 %s66, 1
    %s68 = scalar_select %p65, %s66, %s67
    %p71 = pneg %p65
    %p72 = scmp.eq.s32.totalorder %s9, 1
    %p73 = por %p71, %p72
    %p74 = scmp.ne.s32.totalorder %s66, %s69
    %p75 = scmp.eq.s32.totalorder %s9, 0
    %p76 = por %p74, %p75
    %p77 = scmp.ne.s32.totalorder %s66, %s69
    %p78 = scmp.eq.s32.totalorder %s14, 1
    %p79 = por %p77, %p78
    %p80 = scmp.ne.s32.totalorder %s69, %s70
    %p81 = scmp.eq.s32.totalorder %s14, 0
    %p82 = por %p80, %p81
    %p83 = scmp.ne.s32.totalorder %s69, %s70
    %p84 = scmp.eq.s32.totalorder %s15, 1
    %p85 = por %p83, %p84
    %p87 = scmp.ne.s32.totalorder %s70, %s86
    %p88 = scmp.eq.s32.totalorder %s15, 0
    %p89 = por %p87, %p88
    %s90 = ssub.s32 %s18, %s27
    %p91 = scmp.eq.s32.totalorder %s90, 0
    %s93 = sadd.s32 %s92, 1
    %s94 = scalar_select %p91, %s92, %s93
    %p97 = pneg %p91
    %p98 = scmp.eq.s32.totalorder %s9, 1
    %p99 = por %p97, %p98
    %p100 = scmp.ne.s32.totalorder %s92, %s95
    %p101 = scmp.eq.s32.totalorder %s9, 0
    %p102 = por %p100, %p101
    %p103 = scmp.ne.s32.totalorder %s92, %s95
    %p104 = scmp.eq.s32.totalorder %s14, 1
    %p105 = por %p103, %p104
    %p106 = scmp.ne.s32.totalorder %s95, %s96
    %p107 = scmp.eq.s32.totalorder %s14, 0
    %p108 = por %p106, %p107
    %p109 = scmp.ne.s32.totalorder %s95, %s96
    %p110 = scmp.eq.s32.totalorder %s15, 1
    %p111 = por %p109, %p110
    %p113 = scmp.ne.s32.totalorder %s96, %s112
    %p114 = scmp.eq.s32.totalorder %s15, 0
    %p115 = por %p113, %p114
    %s116 = ssub.s32 %s16, %s35
    %s117 = ssub.s32 %s18, %s27
    %s118 = sor.u32 %s116, %s117
    %s119 = ssub.s32 %s17, %s31
    %s120 = sor.u32 %s118, %s119
    %p121 = scmp.eq.s32.totalorder %s120, 0
    %s123 = sadd.s32 %s122, 1
    %s124 = scalar_select %p121, %s122, %s123
    %p127 = pneg %p121
    %p128 = scmp.eq.s32.totalorder %s9, 1
    %p129 = por %p127, %p128
    %p130 = scmp.ne.s32.totalorder %s122, %s125
    %p131 = scmp.eq.s32.totalorder %s9, 0
    %p132 = por %p130, %p131
    %p133 = scmp.ne.s32.totalorder %s122, %s125
    %p134 = scmp.eq.s32.totalorder %s14, 1
    %p135 = por %p133, %p134
    %p136 = scmp.ne.s32.totalorder %s125, %s126
    %p137 = scmp.eq.s32.totalorder %s14, 0
    %p138 = por %p136, %p137
    %p139 = scmp.ne.s32.totalorder %s125, %s126
    %p140 = scmp.eq.s32.totalorder %s15, 1
    %p141 = por %p139, %p140
    %p143 = scmp.ne.s32.totalorder %s126, %s142
    %p144 = scmp.eq.s32.totalorder %s15, 0
    %p145 = por %p143, %p144
    %p146 = scmp.le.s32.totalorder 1, %s9
    %p147 = scmp.lt.s32.totalorder %s9, 3
    %p148 = pnand %p146, %p147
    %p149 = pneg %p148
    // Predicated region
    $region9: #{conv1x1_bn_relu.1} parent=5 // pred_check
      _
    $region10: #{conv1x1_bn_relu.1} parent=5 // pred_check_branch
      %151 = sbr.rel (%p148) target = $region12
    $region11: #{conv1x1_bn_relu.1} parent=5 // pred_region
      %s152 = ssub.s32 %s9, 1
      // Predicated region
      $region13: #{conv1x1_bn_relu.1} parent=11 // pred_check
        %p153 = pneg %p82
      $region14: #{conv1x1_bn_relu.1} parent=11 // pred_check_branch
        %155 = sbr.rel (%p153) target = $region16
      $region15: #{conv1x1_bn_relu.1} parent=11 // pred_region
        %s156 = smul.u32 4, %s21
        %p157 = scmp.lt.s32.totalorder %s156, 3
        %s158 = scalar_select %p157, %s156, 3
        %s159 = smul.addr %s158, 4
        %s160 = scalar_lea.vmem %s1, %s159
        %s161 = smul.u32 4, %s21
      $region16: #{conv1x1_bn_relu.1} parent=11 // pred_fallthru
        _
      // Predicated region
      $region17: #{conv1x1_bn_relu.1} parent=11 // pred_check
        %p162 = pneg %p108
      $region18: #{conv1x1_bn_relu.1} parent=11 // pred_check_branch
        %164 = sbr.rel (%p162) target = $region20
      $region19: #{conv1x1_bn_relu.1} parent=11 // pred_region
        %s165 = smul.u32 4, %s21
        %p166 = scmp.lt.s32.totalorder %s165, 3
        %s167 = scalar_select %p166, %s165, 3
        %s168 = smul.addr %s167, 8
        %s169 = scalar_lea.vmem %s2, %s168
        %s170 = smul.u32 4, %s21
      $region20: #{conv1x1_bn_relu.1} parent=11 // pred_fallthru
        _
    $region12: #{conv1x1_bn_relu.1} parent=5 // pred_fallthru
      _
    %p171 = scmp.lt.s32.totalorder %s9, 2
    // Predicated region
    $region21: #{conv1x1_bn_relu.1} parent=5 // pred_check
      %p172 = pneg %p171
    $region22: #{conv1x1_bn_relu.1} parent=5 // pred_check_branch
      %174 = sbr.rel (%p172) target = $region24
    $region23: #{conv1x1_bn_relu.1} parent=5 // pred_region
      // Predicated region
      $region25: #{conv1x1_bn_relu.1} parent=23 // pred_check
        %p175 = pneg %p50
      $region26: #{conv1x1_bn_relu.1} parent=23 // pred_check_branch
        %177 = sbr.rel (%p175) target = $region28
      $region27: #{conv1x1_bn_relu.1} parent=23 // pred_region
        %s178 = smul.u32 2, %s17
        %p179 = scmp.lt.s32.totalorder %s16, 1
        %s180 = scalar_select %p179, %s16, 1
        %p181 = scmp.lt.s32.totalorder %s178, 1
        %s182 = scalar_select %p181, %s178, 1
        %s183 = smul.addr %s180, 2
        %s184 = sadd.s32 %s182, %s183
        %s185 = smul.addr %s184, 4
        %s186 = scalar_lea.vmem %s0, %s185
        %s187 = smul.u32 2, %s17
      $region28: #{conv1x1_bn_relu.1} parent=23 // pred_fallthru
        _
    $region24: #{conv1x1_bn_relu.1} parent=5 // pred_fallthru
      _
    %p188 = scmp.le.s32.totalorder 1, %s9
    %p189 = scmp.lt.s32.totalorder %s9, 3
    %p190 = pnand %p188, %p189
    %p191 = pneg %p190
    // Predicated region
    $region29: #{conv1x1_bn_relu.1} parent=5 // pred_check
      _
    $region30: #{conv1x1_bn_relu.1} parent=5 // pred_check_branch
      %193 = sbr.rel (%p190) target = $region32
    $region31: #{conv1x1_bn_relu.1} parent=5 // pred_region
      %s194 = ssub.s32 %s9, 1
      %s195 = smul.u32 2, %s20
      %p196 = scmp.lt.s32.totalorder %s19, 1
      %s197 = scalar_select %p196, %s19, 1
      %p198 = scmp.lt.s32.totalorder %s195, 1
      %s199 = scalar_select %p198, %s195, 1
      %s200 = smul.addr %s197, 2
      %s201 = sadd.s32 %s199, %s200
      %s202 = smul.addr %s201, 4
      %s203 = scalar_lea.vmem %s0, %s202
      %p204 = pneg %p56
      %p205 = pneg %p53
      %s206 = smul.u32 4, %s21
      %p207 = scmp.lt.s32.totalorder %s206, 3
      %s208 = scalar_select %p207, %s206, 3
      %s209 = smul.addr %s208, 4
      %s210 = scalar_lea.vmem %s1, %s209
      %p211 = pneg %p82
      %p212 = pneg %p79
      %s213 = smul.u32 4, %s21
      %p214 = scmp.lt.s32.totalorder %s213, 3
      %s215 = scalar_select %p214, %s213, 3
      %s216 = smul.addr %s215, 8
      %s217 = scalar_lea.vmem %s2, %s216
      %p218 = pneg %p108
      %p219 = pneg %p105
      %p220 = pneg %p138
      %p221 = pneg %p135
      %s222 = smul.u32 4, %s21
      %s223 = smul.u32 2, %s20
      %p224 = scmp.lt.s32.totalorder %s19, 1
      %s225 = scalar_select %p224, %s19, 1
      %p226 = scmp.lt.s32.totalorder %s222, 3
      %s227 = scalar_select %p226, %s222, 3
      %p228 = scmp.lt.s32.totalorder %s223, 1
      %s229 = scalar_select %p228, %s223, 1
      %s230 = smul.addr %s227, 2
      %s231 = sadd.s32 %s229, %s230
      %s232 = smul.addr %s225, 8
      %s233 = sadd.s32 %s231, %s232
      %s234 = smul.addr %s233, 8
      %s235 = scalar_lea.vmem %s3, %s234
      %s236 = smul.u32 2, %s20
      %p237 = scmp.lt.s32.totalorder %s19, 1
      %s238 = scalar_select %p237, %s19, 1
      %p239 = scmp.lt.s32.totalorder %s236, 1
      %s240 = scalar_select %p239, %s236, 1
      %s241 = smul.addr %s238, 2
      %s242 = sadd.s32 %s240, %s241
      %s243 = smul.addr %s242, 4
      %s244 = scalar_lea.vmem %s0, %s243
      %s245 = smul.u32 2, %s20
      %s246 = smul.u32 4, %s21
      %p247 = scmp.lt.s32.totalorder %s246, 3
      %s248 = scalar_select %p247, %s246, 3
      %s249 = smul.addr %s248, 4
      %s250 = scalar_lea.vmem %s1, %s249
      %s251 = smul.u32 4, %s21
      %s252 = smul.u32 4, %s21
      %p253 = scmp.lt.s32.totalorder %s252, 3
      %s254 = scalar_select %p253, %s252, 3
      %s255 = smul.addr %s254, 8
      %s256 = scalar_lea.vmem %s2, %s255
      %s257 = smul.u32 4, %s21
      %s258 = smul.u32 4, %s21
      %s259 = smul.u32 2, %s20
      %p260 = scmp.lt.s32.totalorder %s19, 1
      %s261 = scalar_select %p260, %s19, 1
      %p262 = scmp.lt.s32.totalorder %s258, 3
      %s263 = scalar_select %p262, %s258, 3
      %p264 = scmp.lt.s32.totalorder %s259, 1
      %s265 = scalar_select %p264, %s259, 1
      %s266 = smul.addr %s263, 2
      %s267 = sadd.s32 %s265, %s266
      %s268 = smul.addr %s261, 8
      %s269 = sadd.s32 %s267, %s268
      %s270 = smul.addr %s269, 8
      %s271 = scalar_lea.vmem %s3, %s270
      %s272 = smul.u32 4, %s21
      %s273 = smul.u32 2, %s20
      %v275 = vld [vmem:[%s244] sm:$0xff]
      %v277 = vcombine.high %v275, %v275
      %v279 = vpack.c.bf16 %v275, %v275
      %v280 = vpack.c.bf16 %v277, %v277
      %v281 = vld [vmem:[%s250] sm:$0xf]
      %v282 = vld [vmem:[%s250 + $0x4] sm:$0xf]
      %v283 = vld [vmem:[%s250 + $0x8] sm:$0xf]
      %v284 = vld [vmem:[%s250 + $0xc] sm:$0xf]
      %v285 = vld [vmem:[%s256] sm:$0xff]
      %v286 = vld [vmem:[%s256 + $0x8] sm:$0xff]
      %v287 = vld [vmem:[%s256 + $0x10] sm:$0xff]
      %v288 = vld [vmem:[%s256 + $0x18] sm:$0xff]
      %290 = vset.pattern.permute.xlu0 0
      %291 = vperm.xlu0 %290, %v285
      %v292 = vpop.permute.xlu0 %291
      %295 = vset.pattern.permute.xlu0 0
      %296 = vperm.xlu0 %295, %v286
      %v297 = vpop.permute.xlu0 %296
      %300 = vset.pattern.permute.xlu0 0
      %301 = vperm.xlu0 %300, %v287
      %v302 = vpop.permute.xlu0 %301
      %305 = vset.pattern.permute.xlu0 0
      %306 = vperm.xlu0 %305, %v288
      %v307 = vpop.permute.xlu0 %306
      %v313 = vunpack.c.l.b16 %v281
      %v314 = vunpack.c.l.b16 %v282
      %v315 = vunpack.c.l.b16 %v283
      %v316 = vunpack.c.l.b16 %v284
      %v317 = vpack.c.b16 %v314, %v313
      %v318 = vpack.c.b16 %v316, %v315
      %vm319 = vcmask 31744
      %v321 = vsel %vm319, %v317, 0
      %v324 = vsel %vm319, %v318, 0
      %vm326 = vcmask 1041408
      %v328 = vsel %vm326, %v279, 0
      %v331 = vsel %vm326, %v280, 0
      %333 = vmatprep.subr.bf16.mxu0 %v331
      %334 = vmatpush1.bf16.msra.mxu0 %v328
      %335 = vmatprep.subr.bf16.mxu0 0
      %336 = vmatpush1.bf16.msra.mxu0 0
      %337 = vmatprep.subr.bf16.mxu0 0
      %338 = vmatpush1.bf16.msra.mxu0 0
      %339 = vmatprep.subr.bf16.mxu0 0
      %340 = vmatpush1.bf16.msra.mxu0 0
      %341 = vmatprep.subr.bf16.mxu0 0
      %342 = vmatpush1.bf16.msra.mxu0 0
      %343 = vmatprep.subr.bf16.mxu0 0
      %344 = vmatpush1.bf16.msra.mxu0 0
      %345 = vmatprep.subr.bf16.mxu0 0
      %346 = vmatpush1.bf16.msra.mxu0 0
      %347 = vmatprep.subr.bf16.mxu0 0
      %348 = vmatpush1.bf16.msra.mxu0 0
      %349 = vmatprep.subr.bf16.mxu0 0
      %350 = vmatpush1.bf16.msra.mxu0 0
      %351 = vmatprep.subr.bf16.mxu0 0
      %352 = vmatpush1.bf16.msra.mxu0 0
      %353 = vmatprep.subr.bf16.mxu0 0
      %354 = vmatpush1.bf16.msra.mxu0 0
      %355 = vmatprep.subr.bf16.mxu0 0
      %356 = vmatpush1.bf16.msra.mxu0 0
      %357 = vmatprep.subr.bf16.mxu0 0
      %358 = vmatpush1.bf16.msra.mxu0 0
      %359 = vmatprep.subr.bf16.mxu0 0
      %360 = vmatpush1.bf16.msra.mxu0 0
      %361 = vmatprep.subr.bf16.mxu0 0
      %362 = vmatpush1.bf16.msra.mxu0 0
      %363 = vmatprep.subr.bf16.mxu0 0
      %364 = vmatpush1.bf16.msra.mxu0 0
      %365 = vmatprep.mubr.bf16.mxu0 0
      %366 = vmatmul.mubr.bf16.gmra.mrb[0].mxu0 %v321
      %v367 = vpop.f32.mrb[0].mxu0
      %v368 = vadd.f32 %v292, %v367
      %v369 = vpop.f32.mrb[0].mxu0
      %v370 = vadd.f32 %v292, %v369
      %v371 = vpop.f32.mrb[0].mxu0
      %v372 = vadd.f32 %v297, %v371
      %v373 = vpop.f32.mrb[0].mxu0
      %v374 = vadd.f32 %v297, %v373
      %375 = vmatprep.mubr.bf16.mxu0 0
      %376 = vmatmul.mubr.bf16.gmra.mrb[0].mxu0 %v324
      %v377 = vpop.f32.mrb[0].mxu0
      %v378 = vadd.f32 %v302, %v377
      %v379 = vpop.f32.mrb[0].mxu0
      %v380 = vadd.f32 %v302, %v379
      %v381 = vpop.f32.mrb[0].mxu0
      %v382 = vadd.f32 %v307, %v381
      %v383 = vpop.f32.mrb[0].mxu0
      %v384 = vadd.f32 %v307, %v383
      %385 = vdwg.mxu0
      %v386 = vmax.f32 %v368, 0.0
      %v387 = vmax.f32 %v370, 0.0
      %v388 = vmax.f32 %v372, 0.0
      %v389 = vmax.f32 %v374, 0.0
      %v390 = vmax.f32 %v378, 0.0
      %v391 = vmax.f32 %v380, 0.0
      %v392 = vmax.f32 %v382, 0.0
      %v393 = vmax.f32 %v384, 0.0
      %394 = vst [vmem:[%s271] sm:$0xff] %v386
      %395 = vst [vmem:[%s271 + $0x8] sm:$0xff] %v387
      %396 = vst [vmem:[%s271 + $0x10] sm:$0xff] %v388
      %397 = vst [vmem:[%s271 + $0x18] sm:$0xff] %v389
      %398 = vst [vmem:[%s271 + $0x20] sm:$0xff] %v390
      %399 = vst [vmem:[%s271 + $0x28] sm:$0xff] %v391
      %400 = vst [vmem:[%s271 + $0x30] sm:$0xff] %v392
      %401 = vst [vmem:[%s271 + $0x38] sm:$0xff] %v393
      %s402 = smul.u32 4, %s21
      %s403 = smul.u32 2, %s20
      %p404 = scmp.lt.s32.totalorder %s19, 1
      %s405 = scalar_select %p404, %s19, 1
      %p406 = scmp.lt.s32.totalorder %s402, 3
      %s407 = scalar_select %p406, %s402, 3
      %p408 = scmp.lt.s32.totalorder %s403, 1
      %s409 = scalar_select %p408, %s403, 1
      %s410 = smul.addr %s407, 2
      %s411 = sadd.s32 %s409, %s410
      %s412 = smul.addr %s405, 8
      %s413 = sadd.s32 %s411, %s412
      %s414 = smul.addr %s413, 8
      %s415 = scalar_lea.vmem %s3, %s414
      // Predicated region
      $region33: #{conv1x1_bn_relu.1} parent=31 // pred_check
        %p416 = pneg %p135
      $region34: #{conv1x1_bn_relu.1} parent=31 // pred_check_branch
        %418 = sbr.rel (%p416) target = $region36
      $region35: #{conv1x1_bn_relu.1} parent=31 // pred_region
        %s419 = smul.u32 4, %s21
        %s420 = smul.u32 2, %s20
      $region36: #{conv1x1_bn_relu.1} parent=31 // pred_fallthru
        _
    $region32: #{conv1x1_bn_relu.1} parent=5 // pred_fallthru
      _
    %p421 = scmp.le.s32.totalorder 2, %s9
    // Predicated region
    $region37: #{conv1x1_bn_relu.1} parent=5 // pred_check
      %p422 = pneg %p421
    $region38: #{conv1x1_bn_relu.1} parent=5 // pred_check_branch
      %424 = sbr.rel (%p422) target = $region40
    $region39: #{conv1x1_bn_relu.1} parent=5 // pred_region
      %s425 = ssub.s32 %s9, 2
      // Predicated region
      $region41: #{conv1x1_bn_relu.1} parent=39 // pred_check
        %p426 = pneg %p141
      $region42: #{conv1x1_bn_relu.1} parent=39 // pred_check_branch
        %428 = sbr.rel (%p426) target = $region44
      $region43: #{conv1x1_bn_relu.1} parent=39 // pred_region
        %s429 = smul.u32 4, %s24
        %s430 = smul.u32 2, %s23
        %p431 = scmp.lt.s32.totalorder %s22, 1
        %s432 = scalar_select %p431, %s22, 1
        %p433 = scmp.lt.s32.totalorder %s429, 3
        %s434 = scalar_select %p433, %s429, 3
        %p435 = scmp.lt.s32.totalorder %s430, 1
        %s436 = scalar_select %p435, %s430, 1
        %s437 = smul.addr %s434, 2
        %s438 = sadd.s32 %s436, %s437
        %s439 = smul.addr %s432, 8
        %s440 = sadd.s32 %s438, %s439
        %s441 = smul.addr %s440, 8
        %s442 = scalar_lea.vmem %s3, %s441
      $region44: #{conv1x1_bn_relu.1} parent=39 // pred_fallthru
        _
    $region40: #{conv1x1_bn_relu.1} parent=5 // pred_fallthru
      _
  $region6: #{conv1x1_bn_relu.1} parent=0 // loop_footer
    %s13 = sadd.s32 1, %s9
  $region7: #{conv1x1_bn_relu.1} parent=0 // loop_footer_branch
    %8 = sbr.rel target = $region3
  $region8: #{conv1x1_bn_relu.1} parent=0 // loop_exit
    _

</llo_original>
